<compile_context>
chip_gen: v7x
topology: tpu7x:2x2x1
jax: 0.10.0
libtpu: 0.0.40
codegen_flags: <defaults>
</compile_context>

<pallas_src>
import jax
import jax.numpy as jnp
from jax import lax
from jax.experimental import pallas as pl
from jax.experimental.pallas import tpu as pltpu


def _round_up(x: int, m: int) -> int:
    return ((x + m - 1) // m) * m


def discriminator_kernel(x_ref, w1_ref, b1_ref, w2_ref, b2_ref, o_ref):
    # x_ref:  (tb, D)    bf16 batch tile
    # w1_ref: (D, 128)   bf16 first-layer weight (transposed vs torch layout)
    # b1_ref: (1, 128)   f32
    # w2_ref: (1, 128)   f32 second-layer weight (torch layout)
    # b2_ref: (1,)       f32 scalar in SMEM
    # o_ref:  (1, 1, tb) f32 lane-dense output slab

    # Layer 1 on the MXU: bf16 inputs, f32 accumulation.
    h = jnp.dot(x_ref[...], w1_ref[...], preferred_element_type=jnp.float32)
    h = jnp.maximum(h + b1_ref[...], 0.0)                      # bias + ReLU (VPU)

    # Layer 2: contract on the hidden axis of both operands so the result is
    # (1, tb) with batch on the lane axis — lane-dense, no transpose needed.
    y = lax.dot_general(
        w2_ref[...], h,
        dimension_numbers=(((1,), (1,)), ((), ())),
        preferred_element_type=jnp.float32,
    )
    y = y + b2_ref[0]                                           # scalar bias (SMEM)
    o_ref[...] = jax.nn.sigmoid(y).reshape(o_ref.shape).astype(o_ref.dtype)


def discriminator_forward(x, w1_t, b1, w2_t, b2, *, tb=None):
    """Forward pass of Discriminator.

    x:    (B, D)   float32 input
    w1_t: (128, D) first Linear weight, PyTorch layout
    b1:   (128,)   first Linear bias
    w2_t: (1, 128) second Linear weight, PyTorch layout
    b2:   (1,)     second Linear bias
    Returns (B, 1) float32 in [0, 1].
    """
    B, D = x.shape
    H = w1_t.shape[0]

    # --- choose batch tile -------------------------------------------------
    if tb is None:
        tb = _round_up(B, 8) if B <= 1024 else 512
    Bp = _round_up(B, tb)
    if Bp != B:
        x = jnp.pad(x, ((0, Bp - B), (0, 0)))
    nb = Bp // tb

    # --- parameter / input layouts ----------------------------------------
    x_bf = x.astype(jnp.bfloat16)                  # halve the dominant HBM stream
    w1 = jnp.transpose(w1_t).astype(jnp.bfloat16)  # (D, H), bf16 for the MXU
    b1r = b1.reshape(1, H).astype(jnp.float32)
    w2 = w2_t.reshape(1, H).astype(jnp.float32)
    b2r = b2.reshape(1).astype(jnp.float32)

    out = pl.pallas_call(
        discriminator_kernel,
        out_shape=jax.ShapeDtypeStruct((nb, 1, tb), jnp.float32),
        grid_spec=pltpu.PrefetchScalarGridSpec(
            num_scalar_prefetch=0,
            grid=(nb,),
            in_specs=[
                pl.BlockSpec((tb, D), lambda i: (i, 0)),   # x tile over batch
                pl.BlockSpec((D, H), lambda i: (0, 0)),    # w1 (whole, resident)
                pl.BlockSpec((1, H), lambda i: (0, 0)),    # b1
                pl.BlockSpec((1, H), lambda i: (0, 0)),    # w2 (torch layout)
                pl.BlockSpec(memory_space=pltpu.MemorySpace.SMEM),  # b2 scalar
            ],
            out_specs=pl.BlockSpec((1, 1, tb), lambda i: (i, 0, 0)),
        ),
        compiler_params=pltpu.CompilerParams(
            dimension_semantics=("parallel",),
        ),
    )(x_bf, w1, b1r, w2, b2r)

    # (nb, 1, tb) row-major flatten preserves batch order -> (Bp, 1) -> (B, 1)
    return out.reshape(Bp, 1)[:B]


def reference_forward(x, w1_t, b1, w2_t, b2):
    h = jnp.maximum(x @ w1_t.T + b1, 0.0)
    return jax.nn.sigmoid(h @ w2_t.T + b2)


if __name__ == "__main__":
    key = jax.random.PRNGKey(0)
    k_x, k_w1, k_b1, k_w2, k_b2, k_x2 = jax.random.split(key, 6)

    B = 16   # batch
    D = 32   # input_dim
    H = 128  # hidden size fixed by the module

    x = jax.random.normal(k_x, (B, D), dtype=jnp.float32)

    # PyTorch-layout parameters: Linear(D,128).weight is (128, D),
    # Linear(128,1).weight is (1, 128).
    w1_t = jax.random.normal(k_w1, (H, D), dtype=jnp.float32) * 0.1
    b1 = jax.random.normal(k_b1, (H,), dtype=jnp.float32) * 0.1
    w2_t = jax.random.normal(k_w2, (1, H), dtype=jnp.float32) * 0.1
    b2 = jax.random.normal(k_b2, (1,), dtype=jnp.float32) * 0.1

    # --- small batch: single-block grid ------------------------------------
    out = jax.block_until_ready(discriminator_forward(x, w1_t, b1, w2_t, b2))
    assert out.shape == (B, 1)

    ref_f32 = reference_forward(x, w1_t, b1, w2_t, b2)
    assert jnp.allclose(out, ref_f32, atol=2e-2), "mismatch vs f32 reference"

    ref_bf16 = reference_forward(
        x.astype(jnp.bfloat16).astype(jnp.float32),
        w1_t.astype(jnp.bfloat16).astype(jnp.float32), b1, w2_t, b2)
    assert jnp.allclose(out, ref_bf16, atol=5e-3), "mismatch vs bf16-input reference"

    # --- larger batch: exercises tb=512 multi-block path + padding ---------
    B2 = 1100
    x2 = jax.random.normal(k_x2, (B2, D), dtype=jnp.float32)
    out2 = jax.block_until_ready(discriminator_forward(x2, w1_t, b1, w2_t, b2))
    assert out2.shape == (B2, 1)
    ref2 = reference_forward(x2, w1_t, b1, w2_t, b2)
    assert jnp.allclose(out2, ref2, atol=2e-2), "mismatch vs reference (large batch)"

    print("KERNEL_OK")
</pallas_src>

<mosaic_0001>
module attributes {stable_mosaic.version = 11 : i64} {
  func.func @discriminator_kernel(%arg0: i32, %arg1: memref<16x32xbf16, #tpu.memory_space<vmem>>, %arg2: memref<32x128xbf16, #tpu.memory_space<vmem>>, %arg3: memref<1x128xf32, #tpu.memory_space<vmem>>, %arg4: memref<1x128xf32, #tpu.memory_space<vmem>>, %arg5: memref<1xf32, #tpu.memory_space<smem>>, %arg6: memref<1x1x16xf32, #tpu.memory_space<vmem>>) attributes {dimension_semantics = [#tpu.dimension_semantics<parallel>], iteration_bounds = array<i64: 1>, scalar_prefetch = 0 : i64, scratch_operands = 0 : i64, tpu.core_type = #tpu.core_type<tc>, window_params = [{transform_indices = @transform_0, window_bounds = array<i64: 16, 32>}, {pipeline_mode = #tpu.pipeline_mode<synchronous>, transform_indices = @transform_1, window_bounds = array<i64: 32, 128>}, {pipeline_mode = #tpu.pipeline_mode<synchronous>, transform_indices = @transform_2, window_bounds = array<i64: 1, 128>}, {pipeline_mode = #tpu.pipeline_mode<synchronous>, transform_indices = @transform_3, window_bounds = array<i64: 1, 128>}, {transform_indices = @transform_4, window_bounds = array<i64: 1>}, {transform_indices = @transform_5, window_bounds = array<i64: 1, 1, 16>}]} {
    %c0 = arith.constant 0 : index
    %c0_0 = arith.constant 0 : index
    %0 = vector.load %arg1[%c0, %c0_0] : memref<16x32xbf16, #tpu.memory_space<vmem>>, vector<16x32xbf16>
    %c0_1 = arith.constant 0 : index
    %c0_2 = arith.constant 0 : index
    %1 = vector.load %arg2[%c0_1, %c0_2] : memref<32x128xbf16, #tpu.memory_space<vmem>>, vector<32x128xbf16>
    %cst = arith.constant dense<0.000000e+00> : vector<16x128xf32>
    %2 = tpu.matmul %0, %1, %cst {dimension_numbers = #tpu.dot_dimension_numbers<[1], [0], [0], [1], [0, 0, 1, 1], [], []>} : vector<16x32xbf16>, vector<32x128xbf16>, vector<16x128xf32> -> vector<16x128xf32>
    %c0_3 = arith.constant 0 : index
    %c0_4 = arith.constant 0 : index
    %3 = vector.load %arg3[%c0_3, %c0_4] : memref<1x128xf32, #tpu.memory_space<vmem>>, vector<1x128xf32>
    %4 = vector.broadcast %3 : vector<1x128xf32> to vector<16x128xf32>
    %5 = arith.addf %2, %4 : vector<16x128xf32>
    %cst_5 = arith.constant 0.000000e+00 : f32
    %6 = vector.broadcast %cst_5 : f32 to vector<16x128xf32>
    %7 = arith.maximumf %5, %6 : vector<16x128xf32>
    %c0_6 = arith.constant 0 : index
    %c0_7 = arith.constant 0 : index
    %8 = vector.load %arg4[%c0_6, %c0_7] : memref<1x128xf32, #tpu.memory_space<vmem>>, vector<1x128xf32>
    %cst_8 = arith.constant dense<0.000000e+00> : vector<1x16xf32>
    %9 = tpu.matmul %8, %7, %cst_8 {dimension_numbers = #tpu.dot_dimension_numbers<[1], [1], [0], [0], [0, 0, 1, 0], [], []>} : vector<1x128xf32>, vector<16x128xf32>, vector<1x16xf32> -> vector<1x16xf32>
    %c0_9 = arith.constant 0 : index
    %10 = memref.load %arg5[%c0_9] : memref<1xf32, #tpu.memory_space<smem>>
    %11 = vector.broadcast %10 : f32 to vector<1x16xf32>
    %12 = arith.addf %9, %11 : vector<1x16xf32>
    %13 = arith.negf %12 : vector<1x16xf32>
    %14 = math.exp %13 : vector<1x16xf32>
    %cst_10 = arith.constant 1.000000e+00 : f32
    %15 = vector.broadcast %cst_10 : f32 to vector<1x16xf32>
    %16 = arith.addf %15, %14 : vector<1x16xf32>
    %17 = arith.divf %15, %16 : vector<1x16xf32>
    %18 = vector.shape_cast %17 : vector<1x16xf32> to vector<1x1x16xf32>
    %c0_11 = arith.constant 0 : index
    %c0_12 = arith.constant 0 : index
    %c0_13 = arith.constant 0 : index
    %19 = vector.load %arg6[%c0_11, %c0_12, %c0_13] : memref<1x1x16xf32, #tpu.memory_space<vmem>>, vector<1x1x16xf32>
    tpu.vector_store %arg6[%c0_11, %c0_12, %c0_13], %18 {strides = array<i32>} : memref<1x1x16xf32, #tpu.memory_space<vmem>>, vector<1x1x16xf32>,
    return
  }
  func.func @transform_0(%arg0: i32) -> (i32, i32) {
    %c0_i32 = arith.constant 0 : i32
    %c0_i32_0 = arith.constant 0 : i32
    return %arg0, %c0_i32 : i32, i32
  }
  func.func @transform_1(%arg0: i32) -> (i32, i32) {
    %c0_i32 = arith.constant 0 : i32
    %c0_i32_0 = arith.constant 0 : i32
    %c0_i32_1 = arith.constant 0 : i32
    return %c0_i32, %c0_i32_0 : i32, i32
  }
  func.func @transform_2(%arg0: i32) -> (i32, i32) {
    %c0_i32 = arith.constant 0 : i32
    %c0_i32_0 = arith.constant 0 : i32
    %c0_i32_1 = arith.constant 0 : i32
    return %c0_i32, %c0_i32_0 : i32, i32
  }
  func.func @transform_3(%arg0: i32) -> (i32, i32) {
    %c0_i32 = arith.constant 0 : i32
    %c0_i32_0 = arith.constant 0 : i32
    %c0_i32_1 = arith.constant 0 : i32
    return %c0_i32, %c0_i32_0 : i32, i32
  }
  func.func @transform_4(%arg0: i32) -> i32 {
    %c0_i32 = arith.constant 0 : i32
    %c0_i32_0 = arith.constant 0 : i32
    return %c0_i32 : i32
  }
  func.func @transform_5(%arg0: i32) -> (i32, i32, i32) {
    %c0_i32 = arith.constant 0 : i32
    %c0_i32_0 = arith.constant 0 : i32
    %c0_i32_1 = arith.constant 0 : i32
    return %arg0, %c0_i32, %c0_i32_0 : i32, i32, i32
  }
}

</mosaic_0001>

<llo_original>
// kernel: tpu_custom_call.1
$region0: #{tpu_custom_call.1}
  #allocation0 [shape = 'u32[]', space=smem, size = 0x4, offset = 0x4, fixed_abs, tag = 'smem constant byte address 0x4 - core index']
  #allocation1 [shape = 'u32[144,128]{1,0:T(1,128)}', space=vmem, size = 0x12000, scoped, tag = 'internal scratch']
  #allocation2 [shape = 'f32[1]{0:T(128)S(6)}', space=smem, size = 0x200, scoped, tag = 'scoped memory for tpu_custom_call.1']
  %s0 = inlined_call_operand.hbm [shape: bf16[16,32], index: 0, kind: input, shape index: {}]
  %s1 = inlined_call_operand.hbm [shape: bf16[32,128], index: 1, kind: input, shape index: {}]
  %s2 = inlined_call_operand.vmem [shape: f32[1,128], index: 2, kind: input, shape index: {}]
  %s3 = inlined_call_operand.vmem [shape: f32[1,128], index: 3, kind: input, shape index: {}]
  %s4 = inlined_call_operand.<no memory space> [shape: f32[1], index: 4, kind: input, shape index: {}]
  %s5 = inlined_call_operand.hbm [shape: f32[1,1,16], index: 5, kind: output, shape index: {}]
  %s6 = sld [smem:[#allocation0]]
  $region38: #{tpu_custom_call.1} parent=0
    _
  %s8 = ssub.s32 1, %s6
  %s9 = scalar_select 0, %s8, %s6
  %10 = sst [smem:[#allocation2]] %s4
  $region1: #{tpu_custom_call.1} parent=0
    #allocation3 [shape = 'u8[4096]{0}', space=vmem, size = 0x1000, scoped, tag = 'input window, operand 0, single buffered']
    #allocation4 [shape = 's32[1]{0}', space=sflag, size = 0x4, scoped, tag = 'scoped memory for tpu_custom_call.1']
    #allocation5 [shape = 's32[1]{0}', space=sflag, size = 0x4, scoped, tag = 'scoped memory for tpu_custom_call.1']
    #allocation6 [shape = 'u8[8192]{0}', space=vmem, size = 0x2000, scoped, tag = 'input window, operand 1, single buffered']
    #allocation7 [shape = 's32[1]{0}', space=sflag, size = 0x4, scoped, tag = 'scoped memory for tpu_custom_call.1']
    #allocation8 [shape = 'u8[512]{0}', space=vmem, size = 0x400, scoped, tag = 'output window, operand 0, single buffered']
    %11 = vsyncpa [#allocation4], 0
    %12 = vsyncpa [#allocation7], 0
    %13 = vsyncpa [#allocation5], 0
    // Predicated region
    $region2: #{tpu_custom_call.1} parent=1 // pred_check
      _
    $region3: #{tpu_custom_call.1} parent=1 // pred_check_branch
      %15 = sbr.rel (0) target = $region5
    $region4: #{tpu_custom_call.1} parent=1 // pred_region
      %s17 = ssub.s32 128, 128
      %18 = vsyncadd [#allocation4], %s17
      %s19 = sshll.u32 [#allocation3], 4
      %s20 = int_to_ptr.vmem [resolvable:$true] %s19
      %25 = dma.hbm_to_vmem [thread:$0]  %s0, 128, %s20, [#allocation4], 64, 64, 4
    $region5: #{tpu_custom_call.1} parent=1 // pred_fallthru
      _
    // Predicated region
    $region6: #{tpu_custom_call.1} parent=1 // pred_check
      _
    $region7: #{tpu_custom_call.1} parent=1 // pred_check_branch
      %27 = sbr.rel (0) target = $region9
    $region8: #{tpu_custom_call.1} parent=1 // pred_region
      %s29 = ssub.s32 256, 256
      %30 = vsyncadd [#allocation7], %s29
      %s31 = sshll.u32 [#allocation6], 4
      %s32 = int_to_ptr.vmem [resolvable:$true] %s31
      %37 = dma.hbm_to_vmem [thread:$0]  %s1, 256, %s32, [#allocation7], 64, 64, 4
    $region9: #{tpu_custom_call.1} parent=1 // pred_fallthru
      _
    // Predicated region
    $region10: #{tpu_custom_call.1} parent=1 // pred_check
      _
    $region11: #{tpu_custom_call.1} parent=1 // pred_check_branch
      %39 = sbr.rel (0) target = $region13
    $region12: #{tpu_custom_call.1} parent=1 // pred_region
      _
    $region13: #{tpu_custom_call.1} parent=1 // pred_fallthru
      _
    // Predicated region
    $region14: #{tpu_custom_call.1} parent=1 // pred_check
      _
    $region15: #{tpu_custom_call.1} parent=1 // pred_check_branch
      %41 = sbr.rel (0) target = $region17
    $region16: #{tpu_custom_call.1} parent=1 // pred_region
      _
    $region17: #{tpu_custom_call.1} parent=1 // pred_fallthru
      _
    // Predicated region
    $region18: #{tpu_custom_call.1} parent=1 // pred_check
      _
    $region19: #{tpu_custom_call.1} parent=1 // pred_check_branch
      %43 = sbr.rel (0) target = $region21
    $region20: #{tpu_custom_call.1} parent=1 // pred_region
      _
    $region21: #{tpu_custom_call.1} parent=1 // pred_fallthru
      _
    // Predicated region
    $region22: #{tpu_custom_call.1} parent=1 // pred_check
      _
    $region23: #{tpu_custom_call.1} parent=1 // pred_check_branch
      %45 = sbr.rel (0) target = $region25
    $region24: #{tpu_custom_call.1} parent=1 // pred_region
      %46 = dma.done [#allocation4], 128
    $region25: #{tpu_custom_call.1} parent=1 // pred_fallthru
      _
    // Predicated region
    $region26: #{tpu_custom_call.1} parent=1 // pred_check
      _
    $region27: #{tpu_custom_call.1} parent=1 // pred_check_branch
      %48 = sbr.rel (0) target = $region29
    $region28: #{tpu_custom_call.1} parent=1 // pred_region
      %49 = dma.done [#allocation7], 256
    $region29: #{tpu_custom_call.1} parent=1 // pred_fallthru
      _
    %v51 = vld [vmem:[#allocation3] sm:$0xf]
    %v52 = vld [vmem:[#allocation3 + $0x4] sm:$0xf]
    %v53 = vld [vmem:[#allocation6] sm:$0xf]
    %v54 = vld [vmem:[#allocation6 + $0x4] sm:$0xf]
    %v55 = vld [vmem:[#allocation6 + $0x8] sm:$0xf]
    %v56 = vld [vmem:[#allocation6 + $0xc] sm:$0xf]
    %v57 = vld [vmem:[%s2] sm:$0x1]
    %v59 = vlaneseq
    %v60 = vshrl.u32 %v59, 7
    %v61 = vsub.s32 0, %v60
    %v62 = vrot.slane %v57, %v61
    %v66 = vunpack.c.l.b16 %v51
    %v67 = vunpack.c.l.b16 %v52
    %v68 = vpack.c.b16 %v67, %v66
    %v73 = vunpack.c.l.b16 %v53
    %v74 = vunpack.c.l.b16 %v54
    %v75 = vunpack.c.l.b16 %v55
    %v76 = vunpack.c.l.b16 %v56
    %v77 = vpack.c.b16 %v74, %v73
    %v78 = vpack.c.b16 %v76, %v75
    %vm81 = vcmask 261120
    %v83 = vsel %vm81, %v68, 0
    %85 = vmatprep.subr.bf16.mxu0 0
    %86 = vmatpush1.bf16.msra.mxu0 %v77
    %87 = vmatprep.subr.bf16.mxu0 0
    %88 = vmatpush1.bf16.msra.mxu0 %v78
    %89 = vmatprep.subr.bf16.mxu0 0
    %90 = vmatpush1.bf16.msra.mxu0 0
    %91 = vmatprep.subr.bf16.mxu0 0
    %92 = vmatpush1.bf16.msra.mxu0 0
    %93 = vmatprep.subr.bf16.mxu0 0
    %94 = vmatpush1.bf16.msra.mxu0 0
    %95 = vmatprep.subr.bf16.mxu0 0
    %96 = vmatpush1.bf16.msra.mxu0 0
    %97 = vmatprep.subr.bf16.mxu0 0
    %98 = vmatpush1.bf16.msra.mxu0 0
    %99 = vmatprep.subr.bf16.mxu0 0
    %100 = vmatpush1.bf16.msra.mxu0 0
    %101 = vmatprep.subr.bf16.mxu0 0
    %102 = vmatpush1.bf16.msra.mxu0 0
    %103 = vmatprep.subr.bf16.mxu0 0
    %104 = vmatpush1.bf16.msra.mxu0 0
    %105 = vmatprep.subr.bf16.mxu0 0
    %106 = vmatpush1.bf16.msra.mxu0 0
    %107 = vmatprep.subr.bf16.mxu0 0
    %108 = vmatpush1.bf16.msra.mxu0 0
    %109 = vmatprep.subr.bf16.mxu0 0
    %110 = vmatpush1.bf16.msra.mxu0 0
    %111 = vmatprep.subr.bf16.mxu0 0
    %112 = vmatpush1.bf16.msra.mxu0 0
    %113 = vmatprep.subr.bf16.mxu0 0
    %114 = vmatpush1.bf16.msra.mxu0 0
    %115 = vmatprep.subr.bf16.mxu0 0
    %116 = vmatpush1.bf16.msra.mxu0 0
    %117 = vmatprep.mubr.bf16.mxu0 0
    %118 = vmatmul.mubr.bf16.gmra.mrb[0].mxu0 %v83
    %v119 = vpop.f32.mrb[0].mxu0
    %v120 = vadd.f32 %v62, %v119
    %v121 = vpop.f32.mrb[0].mxu0
    %v122 = vpop.f32.mrb[0].mxu0
    %v123 = vadd.f32 %v62, %v122
    %v124 = vpop.f32.mrb[0].mxu0
    %125 = vdwg.mxu0
    %v126 = vmax.f32 %v120, 0.0
    %v127 = vmax.f32 %v123, 0.0
    %v128 = vld [vmem:[%s3] sm:$0x1]
    %s129 = sld [smem:[#allocation2]]
    %v130 = vstv %s129
    %131 = vmatprep.subr.mxu0 0.0
    %132 = vmatpush1.xpose.msra.mxu0 %v126
    %133 = vmatprep.subr.mxu0 0.0
    %134 = vmatpush1.xpose.msra.mxu0 %v127
    %135 = vmatprep.subr.mxu0 0.0
    %136 = vmatpush1.xpose.msra.mxu0 0.0
    %137 = vmatprep.subr.mxu0 0.0
    %138 = vmatpush1.xpose.msra.mxu0 0.0
    %139 = vmatprep.subr.mxu0 0.0
    %140 = vmatpush1.xpose.msra.mxu0 0.0
    %141 = vmatprep.subr.mxu0 0.0
    %142 = vmatpush1.xpose.msra.mxu0 0.0
    %143 = vmatprep.subr.mxu0 0.0
    %144 = vmatpush1.xpose.msra.mxu0 0.0
    %145 = vmatprep.subr.mxu0 0.0
    %146 = vmatpush1.xpose.msra.mxu0 0.0
    %147 = vmatprep.subr.mxu0 0.0
    %148 = vmatpush1.xpose.msra.mxu0 0.0
    %149 = vmatprep.subr.mxu0 0.0
    %150 = vmatpush1.xpose.msra.mxu0 0.0
    %151 = vmatprep.subr.mxu0 0.0
    %152 = vmatpush1.xpose.msra.mxu0 0.0
    %153 = vmatprep.subr.mxu0 0.0
    %154 = vmatpush1.xpose.msra.mxu0 0.0
    %155 = vmatprep.subr.mxu0 0.0
    %156 = vmatpush1.xpose.msra.mxu0 0.0
    %157 = vmatprep.subr.mxu0 0.0
    %158 = vmatpush1.xpose.msra.mxu0 0.0
    %159 = vmatprep.subr.mxu0 0.0
    %160 = vmatpush1.xpose.msra.mxu0 0.0
    %161 = vmatprep.subr.mxu0 0.0
    %162 = vmatpush1.xpose.msra.mxu0 0.0
    %163 = vmatprep.subr.mxu0 0.0
    %164 = vmatpush1.xpose.msra.mxu0 0.0
    %165 = vmatprep.subr.mxu0 0.0
    %166 = vmatpush1.xpose.msra.mxu0 0.0
    %167 = vmatprep.subr.mxu0 0.0
    %168 = vmatpush1.xpose.msra.mxu0 0.0
    %169 = vmatprep.subr.mxu0 0.0
    %170 = vmatpush1.xpose.msra.mxu0 0.0
    %171 = vmatprep.subr.mxu0 0.0
    %172 = vmatpush1.xpose.msra.mxu0 0.0
    %173 = vmatprep.subr.mxu0 0.0
    %174 = vmatpush1.xpose.msra.mxu0 0.0
    %175 = vmatprep.subr.mxu0 0.0
    %176 = vmatpush1.xpose.msra.mxu0 0.0
    %177 = vmatprep.subr.mxu0 0.0
    %178 = vmatpush1.xpose.msra.mxu0 0.0
    %179 = vmatprep.subr.mxu0 0.0
    %180 = vmatpush1.xpose.msra.mxu0 0.0
    %181 = vmatprep.subr.mxu0 0.0
    %182 = vmatpush1.xpose.msra.mxu0 0.0
    %183 = vmatprep.subr.mxu0 0.0
    %184 = vmatpush1.xpose.msra.mxu0 0.0
    %185 = vmatprep.subr.mxu0 0.0
    %186 = vmatpush1.xpose.msra.mxu0 0.0
    %187 = vmatprep.subr.mxu0 0.0
    %188 = vmatpush1.xpose.msra.mxu0 0.0
    %189 = vmatprep.subr.mxu0 0.0
    %190 = vmatpush1.xpose.msra.mxu0 0.0
    %191 = vmatprep.subr.mxu0 0.0
    %192 = vmatpush1.xpose.msra.mxu0 0.0
    %193 = vmatprep.subr.mxu0 0.0
    %194 = vmatpush1.xpose.msra.mxu0 0.0
    %195 = vmatprep.mubr.f32.mxu0 0.0
    %196 = vmatmul.mubr.f32.gmra.mrb[0].mxu0 %v128
    %v197 = vpop.f32.mrb[0].mxu0
    %v198 = vadd.f32 %v130, %v197
    %v199 = vpop.f32.mrb[0].mxu0
    %200 = vdwg.mxu0
    %v201 = vxor.u32 %v198, 2147483648
    %v202 = vmul.f32 %v201, 1.442695
    %v203 = vpow.pop %v202
    %v204 = vadd.f32 %v203, 1.0
    %v205 = vrcp.pop %v204
    %v206 = vmul.f32 1.0, %v205
    %vm207 = vcmask 122880
    %208 = vst.msk [vmem:[#allocation8] sm:$0x1] %vm207, %v206
    // Predicated region
    $region30: #{tpu_custom_call.1} parent=1 // pred_check
      _
    $region31: #{tpu_custom_call.1} parent=1 // pred_check_branch
      %210 = sbr.rel (0) target = $region33
    $region32: #{tpu_custom_call.1} parent=1 // pred_region
      %s212 = ssub.s32 16, 16
      %213 = vsyncadd [#allocation5], %s212
      %s215 = sshll.u32 [#allocation8], 4
      %s216 = int_to_ptr.vmem [resolvable:$true] %s215
      %218 = dma.vmem_to_hbm [thread:$0]  %s216, 16, %s5, [#allocation5]
    $region33: #{tpu_custom_call.1} parent=1 // pred_fallthru
      _
    // Predicated region
    $region34: #{tpu_custom_call.1} parent=1 // pred_check
      _
    $region35: #{tpu_custom_call.1} parent=1 // pred_check_branch
      %220 = sbr.rel (0) target = $region37
    $region36: #{tpu_custom_call.1} parent=1 // pred_region
      %221 = dma.done [#allocation5], 16
    $region37: #{tpu_custom_call.1} parent=1 // pred_fallthru
      _
    %222 = vsyncpa [#allocation4], 1
    %223 = vsyncpa [#allocation7], 1
    %224 = vsyncpa [#allocation5], 1

</llo_original>
